<compile_context>
chip_gen: v7x
topology: tpu7x:2x2x1
jax: 0.10.0
libtpu: 0.0.40
codegen_flags: <defaults>
</compile_context>

<pallas_src>
import jax
import jax.numpy as jnp
from jax.experimental import pallas as pl
from jax.experimental.pallas import tpu as pltpu


# ----------------------------------------------------------------------------
# Weight packing: fold the dx taps + channel mixing of a 3x3 conv into a
# banded matrix so a whole output row is one matmul per dy.
# ----------------------------------------------------------------------------
def _pack_conv3x3(w_hwio, width, *, in_padded, out_padded):
    """Pack (3,3,Cin,Cout) conv weights into 3 band matrices.

    Returns P with shape (3, Win*Cin, Wout*Cout) where
      Win  = width + 2 if in_padded  else width
      Wout = width + 2 if out_padded else width
    such that for output pixel column w and row-offset dy:
      P[dy, wi*Cin + ci, wo*Cout + co] = w[dy, dx, ci, co]
      with wi = w + dx + (0 if in_padded else -1)   (rows outside [0,Win) are
      simply absent => implicit zero padding in W), and
           wo = w + (1 if out_padded else 0)        (border output columns are
      zero-filled => the result already carries its own W halo).
    """
    kh, kw, cin, cout = w_hwio.shape
    win = width + 2 if in_padded else width
    shift = 0 if in_padded else -1
    wi = jnp.arange(win)[:, None, None]
    dx = jnp.arange(kw)[None, :, None]
    wo = jnp.arange(width)[None, None, :]
    sel = (wi == wo + dx + shift).astype(w_hwio.dtype)          # (Win, 3, W)
    p = jnp.einsum("pxw,yxio->ypiwo", sel, w_hwio)              # (3,Win,Cin,W,Cout)
    p = p.reshape(kh, win * cin, width * cout)
    if out_padded:
        p = jnp.pad(p, ((0, 0), (0, 0), (cout, cout)))          # zero W-halo cols
    return p


# ----------------------------------------------------------------------------
# Fused kernel: conv1 + bias + ReLU + conv2 + bias + ReLU for one image.
# ----------------------------------------------------------------------------
def _block_fused_kernel(x_ref, w1_ref, b1_ref, w2_ref, b2_ref, o_ref,
                        xpad1, xpad2):
    # x_ref : (1, H, W*Cin)            input plane (no halo)
    # w1_ref: (3, W*Cin, (W+2)*Cmid)   packed conv1 weights (emit W halo)
    # b1_ref: (1, (W+2)*Cmid)          conv1 bias, zero on halo columns
    # w2_ref: (3, (W+2)*Cmid, W*Cout)  packed conv2 weights (consume W halo)
    # b2_ref: (1, W*Cout)              conv2 bias
    # o_ref : (1, H, W*Cout)           output plane (lane-dense: W*Cout=128)
    # xpad1 : VMEM (H+2, W*Cin)        row-padded input plane
    # xpad2 : VMEM (H+2, (W+2)*Cmid)   row-padded intermediate plane
    H = x_ref.shape[1]

    # ---- layer 1: build row-padded plane (W halo handled by w1 packing) ----
    zrow1 = jnp.zeros((1, xpad1.shape[1]), jnp.float32)
    xpad1[0:1, :] = zrow1
    xpad1[H + 1:H + 2, :] = zrow1
    xpad1[1:H + 1, :] = x_ref[0].astype(jnp.float32)

    acc1 = jnp.zeros((H, w1_ref.shape[2]), jnp.float32)
    for dy in range(3):                      # 3 MXU matmuls (f32 accumulate)
        acc1 = acc1 + jnp.dot(xpad1[dy:dy + H, :], w1_ref[dy],
                              preferred_element_type=jnp.float32)
    acc1 = jnp.maximum(acc1 + b1_ref[...], 0.0)   # bias + ReLU (halo stays 0)

    # ---- layer 2: intermediate stays in VMEM (never goes to HBM) ----------
    zrow2 = jnp.zeros((1, xpad2.shape[1]), jnp.float32)
    xpad2[0:1, :] = zrow2
    xpad2[H + 1:H + 2, :] = zrow2
    xpad2[1:H + 1, :] = acc1                 # aligned lane-start store

    acc2 = jnp.zeros((H, w2_ref.shape[2]), jnp.float32)
    for dy in range(3):
        acc2 = acc2 + jnp.dot(xpad2[dy:dy + H, :], w2_ref[dy],
                              preferred_element_type=jnp.float32)
    acc2 = jnp.maximum(acc2 + b2_ref[...], 0.0)
    o_ref[0] = acc2.astype(o_ref.dtype)      # lane-dense (H, 128) store


# ----------------------------------------------------------------------------
# Public forward: NCHW in / NCHW out, matching the PyTorch module.
# ----------------------------------------------------------------------------
@jax.jit
def block_forward(x_nchw, params):
    N, Cin, H, W = x_nchw.shape
    w1, b1 = params["w1"], params["b1"]        # (3,3,Cin,Cmid), (Cmid,)
    w2, b2 = params["w2"], params["b2"]        # (3,3,Cmid,Cout), (Cout,)
    Cmid = w1.shape[-1]
    Cout = w2.shape[-1]

    # Pack weights/biases into the banded-matmul layout (tiny, done on device).
    w1p = _pack_conv3x3(w1, W, in_padded=False, out_padded=True)
    b1p = jnp.pad(jnp.tile(b1, W), (Cmid, Cmid)).reshape(1, -1)
    w2p = _pack_conv3x3(w2, W, in_padded=True, out_padded=False)
    b2p = jnp.tile(b2, W).reshape(1, -1)

    # NCHW -> NHWC -> 2-D planes (rows = H, lanes = W*C). No jnp.pad of x.
    x2d = jnp.transpose(x_nchw, (0, 2, 3, 1)).reshape(N, H, W * Cin)

    flops = 2 * 9 * N * H * W * (Cin * Cmid + Cmid * Cout)
    bytes_accessed = 4 * (x2d.size + w1p.size + b1p.size + w2p.size +
                          b2p.size + N * H * W * Cout)

    out2d = pl.pallas_call(
        _block_fused_kernel,
        out_shape=jax.ShapeDtypeStruct((N, H, W * Cout), x_nchw.dtype),
        grid=(N,),
        in_specs=[
            pl.BlockSpec((1, H, W * Cin), lambda n: (n, 0, 0)),
            pl.BlockSpec((3, W * Cin, (W + 2) * Cmid), lambda n: (0, 0, 0)),
            pl.BlockSpec((1, (W + 2) * Cmid), lambda n: (0, 0)),
            pl.BlockSpec((3, (W + 2) * Cmid, W * Cout), lambda n: (0, 0, 0)),
            pl.BlockSpec((1, W * Cout), lambda n: (0, 0)),
        ],
        out_specs=pl.BlockSpec((1, H, W * Cout), lambda n: (n, 0, 0)),
        scratch_shapes=[
            pltpu.VMEM((H + 2, W * Cin), jnp.float32),        # padded input
            pltpu.VMEM((H + 2, (W + 2) * Cmid), jnp.float32),  # intermediate
        ],
        compiler_params=pltpu.CompilerParams(
            dimension_semantics=("parallel",)),
        cost_estimate=pl.CostEstimate(flops=flops, transcendentals=0,
                                      bytes_accessed=bytes_accessed),
    )(x2d, w1p, b1p, w2p, b2p)

    out = out2d.reshape(N, H, W, Cout)
    return jnp.transpose(out, (0, 3, 1, 2))    # NHWC -> NCHW


# ----------------------------------------------------------------------------
# Parameters + pure-JAX reference for correctness checking.
# ----------------------------------------------------------------------------
def init_block_params(key, inp_size, out_size, dtype=jnp.float32):
    """Deterministic synthetic parameters matching torch.nn.Conv2d shapes."""
    k1, k2, k3, k4 = jax.random.split(key, 4)
    s1 = 1.0 / jnp.sqrt(inp_size * 9.0)
    s2 = 1.0 / jnp.sqrt(out_size * 9.0)
    # Stored HWIO = (kh, kw, Cin, Cout); PyTorch uses (Cout, Cin, kh, kw).
    w1 = jax.random.uniform(k1, (3, 3, inp_size, out_size), dtype, -s1, s1)
    b1 = jax.random.uniform(k2, (out_size,), dtype, -s1, s1)
    w2 = jax.random.uniform(k3, (3, 3, out_size, out_size), dtype, -s2, s2)
    b2 = jax.random.uniform(k4, (out_size,), dtype, -s2, s2)
    return {"w1": w1, "b1": b1, "w2": w2, "b2": b2}


def _reference_forward(x_nchw, params):
    """Pure-JAX reference (lax.conv) for correctness checking."""
    def conv(x, w_hwio, b):
        w_oihw = jnp.transpose(w_hwio, (3, 2, 0, 1))
        y = jax.lax.conv_general_dilated(
            x, w_oihw, window_strides=(1, 1), padding=((1, 1), (1, 1)),
            dimension_numbers=("NCHW", "OIHW", "NCHW"))
        return jax.nn.relu(y + b[None, :, None, None])

    h = conv(x_nchw, params["w1"], params["b1"])
    return conv(h, params["w2"], params["b2"])


if __name__ == "__main__":
    key = jax.random.PRNGKey(0)
    k_param, k_x = jax.random.split(key)

    N, Cin, Hh, Ww = 2, 4, 16, 16
    Cout = 8

    params = init_block_params(k_param, Cin, Cout)
    x = jax.random.normal(k_x, (N, Cin, Hh, Ww), dtype=jnp.float32)

    out = jax.block_until_ready(block_forward(x, params))
    ref = jax.block_until_ready(_reference_forward(x, params))

    assert out.shape == (N, Cout, Hh, Ww)
    assert jnp.allclose(out, ref, atol=1e-5, rtol=1e-5)

    print("KERNEL_OK")
</pallas_src>

<mosaic_0001>
module attributes {stable_mosaic.version = 11 : i64} {
  func.func @_block_fused_kernel(%arg0: i32, %arg1: memref<1x16x64xf32, #tpu.memory_space<vmem>>, %arg2: memref<3x64x144xf32, #tpu.memory_space<vmem>>, %arg3: memref<1x144xf32, #tpu.memory_space<vmem>>, %arg4: memref<3x144x128xf32, #tpu.memory_space<vmem>>, %arg5: memref<1x128xf32, #tpu.memory_space<vmem>>, %arg6: memref<1x16x128xf32, #tpu.memory_space<vmem>>, %arg7: memref<18x64xf32, #tpu.memory_space<vmem>>, %arg8: memref<18x144xf32, #tpu.memory_space<vmem>>) attributes {dimension_semantics = [#tpu.dimension_semantics<parallel>], iteration_bounds = array<i64: 2>, scalar_prefetch = 0 : i64, scratch_operands = 2 : i64, tpu.core_type = #tpu.core_type<tc>, window_params = [{transform_indices = @transform_0, window_bounds = array<i64: 1, 16, 64>}, {pipeline_mode = #tpu.pipeline_mode<synchronous>, transform_indices = @transform_1, window_bounds = array<i64: 3, 64, 144>}, {pipeline_mode = #tpu.pipeline_mode<synchronous>, transform_indices = @transform_2, window_bounds = array<i64: 1, 144>}, {pipeline_mode = #tpu.pipeline_mode<synchronous>, transform_indices = @transform_3, window_bounds = array<i64: 3, 144, 128>}, {pipeline_mode = #tpu.pipeline_mode<synchronous>, transform_indices = @transform_4, window_bounds = array<i64: 1, 128>}, {transform_indices = @transform_5, window_bounds = array<i64: 1, 16, 128>}]} {
    %cst = arith.constant 0.000000e+00 : f32
    %0 = vector.broadcast %cst : f32 to vector<1x64xf32>
    %c0 = arith.constant 0 : index
    %c0_0 = arith.constant 0 : index
    %1 = vector.load %arg7[%c0, %c0_0] : memref<18x64xf32, #tpu.memory_space<vmem>>, vector<1x64xf32>
    tpu.vector_store %arg7[%c0, %c0_0], %0 {strides = array<i32>} : memref<18x64xf32, #tpu.memory_space<vmem>>, vector<1x64xf32>,
    %c17 = arith.constant 17 : index
    %c0_1 = arith.constant 0 : index
    %2 = vector.load %arg7[%c17, %c0_1] : memref<18x64xf32, #tpu.memory_space<vmem>>, vector<1x64xf32>
    tpu.vector_store %arg7[%c17, %c0_1], %0 {strides = array<i32>} : memref<18x64xf32, #tpu.memory_space<vmem>>, vector<1x64xf32>,
    %c0_2 = arith.constant 0 : index
    %c0_3 = arith.constant 0 : index
    %c0_4 = arith.constant 0 : index
    %3 = vector.load %arg1[%c0_2, %c0_3, %c0_4] : memref<1x16x64xf32, #tpu.memory_space<vmem>>, vector<1x16x64xf32>
    %4 = vector.shape_cast %3 : vector<1x16x64xf32> to vector<16x64xf32>
    %c1 = arith.constant 1 : index
    %c0_5 = arith.constant 0 : index
    %5 = vector.load %arg7[%c1, %c0_5] : memref<18x64xf32, #tpu.memory_space<vmem>>, vector<16x64xf32>
    tpu.vector_store %arg7[%c1, %c0_5], %4 {strides = array<i32>} : memref<18x64xf32, #tpu.memory_space<vmem>>, vector<16x64xf32>,
    %cst_6 = arith.constant 0.000000e+00 : f32
    %6 = vector.broadcast %cst_6 : f32 to vector<16x144xf32>
    %c0_7 = arith.constant 0 : index
    %c0_8 = arith.constant 0 : index
    %7 = vector.load %arg7[%c0_7, %c0_8] : memref<18x64xf32, #tpu.memory_space<vmem>>, vector<16x64xf32>
    %c0_9 = arith.constant 0 : index
    %c0_10 = arith.constant 0 : index
    %c0_11 = arith.constant 0 : index
    %8 = vector.load %arg2[%c0_9, %c0_10, %c0_11] : memref<3x64x144xf32, #tpu.memory_space<vmem>>, vector<1x64x144xf32>
    %9 = vector.shape_cast %8 : vector<1x64x144xf32> to vector<64x144xf32>
    %cst_12 = arith.constant dense<0.000000e+00> : vector<16x144xf32>
    %10 = tpu.matmul %7, %9, %cst_12 {dimension_numbers = #tpu.dot_dimension_numbers<[1], [0], [0], [1], [0, 0, 1, 1], [], []>} : vector<16x64xf32>, vector<64x144xf32>, vector<16x144xf32> -> vector<16x144xf32>
    %11 = arith.addf %6, %10 : vector<16x144xf32>
    %c1_13 = arith.constant 1 : index
    %c0_14 = arith.constant 0 : index
    %12 = vector.load %arg7[%c1_13, %c0_14] : memref<18x64xf32, #tpu.memory_space<vmem>>, vector<16x64xf32>
    %c1_15 = arith.constant 1 : index
    %c0_16 = arith.constant 0 : index
    %c0_17 = arith.constant 0 : index
    %13 = vector.load %arg2[%c1_15, %c0_16, %c0_17] : memref<3x64x144xf32, #tpu.memory_space<vmem>>, vector<1x64x144xf32>
    %14 = vector.shape_cast %13 : vector<1x64x144xf32> to vector<64x144xf32>
    %cst_18 = arith.constant dense<0.000000e+00> : vector<16x144xf32>
    %15 = tpu.matmul %12, %14, %cst_18 {dimension_numbers = #tpu.dot_dimension_numbers<[1], [0], [0], [1], [0, 0, 1, 1], [], []>} : vector<16x64xf32>, vector<64x144xf32>, vector<16x144xf32> -> vector<16x144xf32>
    %16 = arith.addf %11, %15 : vector<16x144xf32>
    %c2 = arith.constant 2 : index
    %c0_19 = arith.constant 0 : index
    %17 = vector.load %arg7[%c2, %c0_19] : memref<18x64xf32, #tpu.memory_space<vmem>>, vector<16x64xf32>
    %c2_20 = arith.constant 2 : index
    %c0_21 = arith.constant 0 : index
    %c0_22 = arith.constant 0 : index
    %18 = vector.load %arg2[%c2_20, %c0_21, %c0_22] : memref<3x64x144xf32, #tpu.memory_space<vmem>>, vector<1x64x144xf32>
    %19 = vector.shape_cast %18 : vector<1x64x144xf32> to vector<64x144xf32>
    %cst_23 = arith.constant dense<0.000000e+00> : vector<16x144xf32>
    %20 = tpu.matmul %17, %19, %cst_23 {dimension_numbers = #tpu.dot_dimension_numbers<[1], [0], [0], [1], [0, 0, 1, 1], [], []>} : vector<16x64xf32>, vector<64x144xf32>, vector<16x144xf32> -> vector<16x144xf32>
    %21 = arith.addf %16, %20 : vector<16x144xf32>
    %c0_24 = arith.constant 0 : index
    %c0_25 = arith.constant 0 : index
    %22 = vector.load %arg3[%c0_24, %c0_25] : memref<1x144xf32, #tpu.memory_space<vmem>>, vector<1x144xf32>
    %23 = vector.broadcast %22 : vector<1x144xf32> to vector<16x144xf32>
    %24 = arith.addf %21, %23 : vector<16x144xf32>
    %cst_26 = arith.constant 0.000000e+00 : f32
    %25 = vector.broadcast %cst_26 : f32 to vector<16x144xf32>
    %26 = arith.maximumf %24, %25 : vector<16x144xf32>
    %cst_27 = arith.constant 0.000000e+00 : f32
    %27 = vector.broadcast %cst_27 : f32 to vector<1x144xf32>
    %c0_28 = arith.constant 0 : index
    %c0_29 = arith.constant 0 : index
    %28 = vector.load %arg8[%c0_28, %c0_29] : memref<18x144xf32, #tpu.memory_space<vmem>>, vector<1x144xf32>
    tpu.vector_store %arg8[%c0_28, %c0_29], %27 {strides = array<i32>} : memref<18x144xf32, #tpu.memory_space<vmem>>, vector<1x144xf32>,
    %c17_30 = arith.constant 17 : index
    %c0_31 = arith.constant 0 : index
    %29 = vector.load %arg8[%c17_30, %c0_31] : memref<18x144xf32, #tpu.memory_space<vmem>>, vector<1x144xf32>
    tpu.vector_store %arg8[%c17_30, %c0_31], %27 {strides = array<i32>} : memref<18x144xf32, #tpu.memory_space<vmem>>, vector<1x144xf32>,
    %c1_32 = arith.constant 1 : index
    %c0_33 = arith.constant 0 : index
    %30 = vector.load %arg8[%c1_32, %c0_33] : memref<18x144xf32, #tpu.memory_space<vmem>>, vector<16x144xf32>
    tpu.vector_store %arg8[%c1_32, %c0_33], %26 {strides = array<i32>} : memref<18x144xf32, #tpu.memory_space<vmem>>, vector<16x144xf32>,
    %cst_34 = arith.constant 0.000000e+00 : f32
    %31 = vector.broadcast %cst_34 : f32 to vector<16x128xf32>
    %c0_35 = arith.constant 0 : index
    %c0_36 = arith.constant 0 : index
    %32 = vector.load %arg8[%c0_35, %c0_36] : memref<18x144xf32, #tpu.memory_space<vmem>>, vector<16x144xf32>
    %c0_37 = arith.constant 0 : index
    %c0_38 = arith.constant 0 : index
    %c0_39 = arith.constant 0 : index
    %33 = vector.load %arg4[%c0_37, %c0_38, %c0_39] : memref<3x144x128xf32, #tpu.memory_space<vmem>>, vector<1x144x128xf32>
    %34 = vector.shape_cast %33 : vector<1x144x128xf32> to vector<144x128xf32>
    %cst_40 = arith.constant dense<0.000000e+00> : vector<16x128xf32>
    %35 = tpu.matmul %32, %34, %cst_40 {dimension_numbers = #tpu.dot_dimension_numbers<[1], [0], [0], [1], [0, 0, 1, 1], [], []>} : vector<16x144xf32>, vector<144x128xf32>, vector<16x128xf32> -> vector<16x128xf32>
    %36 = arith.addf %31, %35 : vector<16x128xf32>
    %c1_41 = arith.constant 1 : index
    %c0_42 = arith.constant 0 : index
    %37 = vector.load %arg8[%c1_41, %c0_42] : memref<18x144xf32, #tpu.memory_space<vmem>>, vector<16x144xf32>
    %c1_43 = arith.constant 1 : index
    %c0_44 = arith.constant 0 : index
    %c0_45 = arith.constant 0 : index
    %38 = vector.load %arg4[%c1_43, %c0_44, %c0_45] : memref<3x144x128xf32, #tpu.memory_space<vmem>>, vector<1x144x128xf32>
    %39 = vector.shape_cast %38 : vector<1x144x128xf32> to vector<144x128xf32>
    %cst_46 = arith.constant dense<0.000000e+00> : vector<16x128xf32>
    %40 = tpu.matmul %37, %39, %cst_46 {dimension_numbers = #tpu.dot_dimension_numbers<[1], [0], [0], [1], [0, 0, 1, 1], [], []>} : vector<16x144xf32>, vector<144x128xf32>, vector<16x128xf32> -> vector<16x128xf32>
    %41 = arith.addf %36, %40 : vector<16x128xf32>
    %c2_47 = arith.constant 2 : index
    %c0_48 = arith.constant 0 : index
    %42 = vector.load %arg8[%c2_47, %c0_48] : memref<18x144xf32, #tpu.memory_space<vmem>>, vector<16x144xf32>
    %c2_49 = arith.constant 2 : index
    %c0_50 = arith.constant 0 : index
    %c0_51 = arith.constant 0 : index
    %43 = vector.load %arg4[%c2_49, %c0_50, %c0_51] : memref<3x144x128xf32, #tpu.memory_space<vmem>>, vector<1x144x128xf32>
    %44 = vector.shape_cast %43 : vector<1x144x128xf32> to vector<144x128xf32>
    %cst_52 = arith.constant dense<0.000000e+00> : vector<16x128xf32>
    %45 = tpu.matmul %42, %44, %cst_52 {dimension_numbers = #tpu.dot_dimension_numbers<[1], [0], [0], [1], [0, 0, 1, 1], [], []>} : vector<16x144xf32>, vector<144x128xf32>, vector<16x128xf32> -> vector<16x128xf32>
    %46 = arith.addf %41, %45 : vector<16x128xf32>
    %c0_53 = arith.constant 0 : index
    %c0_54 = arith.constant 0 : index
    %47 = vector.load %arg5[%c0_53, %c0_54] : memref<1x128xf32, #tpu.memory_space<vmem>>, vector<1x128xf32>
    %48 = vector.broadcast %47 : vector<1x128xf32> to vector<16x128xf32>
    %49 = arith.addf %46, %48 : vector<16x128xf32>
    %cst_55 = arith.constant 0.000000e+00 : f32
    %50 = vector.broadcast %cst_55 : f32 to vector<16x128xf32>
    %51 = arith.maximumf %49, %50 : vector<16x128xf32>
    %c0_56 = arith.constant 0 : index
    %c0_57 = arith.constant 0 : index
    %c0_58 = arith.constant 0 : index
    %52 = vector.load %arg6[%c0_56, %c0_57, %c0_58] : memref<1x16x128xf32, #tpu.memory_space<vmem>>, vector<1x16x128xf32>
    %53 = vector.shape_cast %52 : vector<1x16x128xf32> to vector<16x128xf32>
    %54 = vector.shape_cast %51 : vector<16x128xf32> to vector<1x16x128xf32>
    tpu.vector_store %arg6[%c0_56, %c0_57, %c0_58], %54 {strides = array<i32>} : memref<1x16x128xf32, #tpu.memory_space<vmem>>, vector<1x16x128xf32>,
    return
  }
  func.func @transform_0(%arg0: i32) -> (i32, i32, i32) {
    %c0_i32 = arith.constant 0 : i32
    %c0_i32_0 = arith.constant 0 : i32
    %c0_i32_1 = arith.constant 0 : i32
    return %arg0, %c0_i32, %c0_i32_0 : i32, i32, i32
  }
  func.func @transform_1(%arg0: i32) -> (i32, i32, i32) {
    %c0_i32 = arith.constant 0 : i32
    %c0_i32_0 = arith.constant 0 : i32
    %c0_i32_1 = arith.constant 0 : i32
    %c0_i32_2 = arith.constant 0 : i32
    return %c0_i32, %c0_i32_0, %c0_i32_1 : i32, i32, i32
  }
  func.func @transform_2(%arg0: i32) -> (i32, i32) {
    %c0_i32 = arith.constant 0 : i32
    %c0_i32_0 = arith.constant 0 : i32
    %c0_i32_1 = arith.constant 0 : i32
    return %c0_i32, %c0_i32_0 : i32, i32
  }
  func.func @transform_3(%arg0: i32) -> (i32, i32, i32) {
    %c0_i32 = arith.constant 0 : i32
    %c0_i32_0 = arith.constant 0 : i32
    %c0_i32_1 = arith.constant 0 : i32
    %c0_i32_2 = arith.constant 0 : i32
    return %c0_i32, %c0_i32_0, %c0_i32_1 : i32, i32, i32
  }
  func.func @transform_4(%arg0: i32) -> (i32, i32) {
    %c0_i32 = arith.constant 0 : i32
    %c0_i32_0 = arith.constant 0 : i32
    %c0_i32_1 = arith.constant 0 : i32
    return %c0_i32, %c0_i32_0 : i32, i32
  }
  func.func @transform_5(%arg0: i32) -> (i32, i32, i32) {
    %c0_i32 = arith.constant 0 : i32
    %c0_i32_0 = arith.constant 0 : i32
    %c0_i32_1 = arith.constant 0 : i32
    return %arg0, %c0_i32, %c0_i32_0 : i32, i32, i32
  }
}

</mosaic_0001>

<llo_original>
// kernel: tile.13
$region0: #{tile.13}
  #allocation0 [shape = 's32[1]{0}', space=sflag, size = 0x4, scoped, tag = 'scoped memory for tile.13']
  %s0 = inlined_call_operand.vmem [shape: f32[8], index: 0, kind: input, shape index: {}]
  %s1 = inlined_call_operand.vmem [shape: f32[16,8], index: 1, kind: output, shape index: {}]
  // Predicated region
  $region2: #{tile.13} parent=0 // pred_check
    _
  $region3: #{tile.13} parent=0 // pred_check_branch
    %3 = sbr.rel (0) target = $region5
  $region4: #{tile.13} parent=0 // pred_region
    _
  $region5: #{tile.13} parent=0 // pred_fallthru
    _
  %v4 = vld [vmem:[%s0] ss:$0 sm:$0xff]
  %5 = vst [vmem:[%s1] sm:$0xff] %v4
  %s6 = scalar_lea.vmem %s1, 8
  %7 = vst [vmem:[%s6] sm:$0xff] %v4

// kernel: tile.14
$region0: #{tile.14}
  %s0 = inlined_call_operand.vmem [shape: f32[16,8], index: 0, kind: input, shape index: {}]
  %s1 = inlined_call_operand.vmem [shape: f32[128], index: 1, kind: output, shape index: {}]
  $region1: #{tile.14} parent=0
    #allocation0 [shape = 'u8[4096]{0}', space=vmem, size = 0x1000, scoped, tag = 'scoped mem for output reshape']
    %v2 = vld [vmem:[%s0] sm:$0x1]
    %vm3 = vcmask 64512
    %4 = vst.msk [vmem:[#allocation0] sm:$0x1] %vm3, %v2
    %s5 = scalar_lea.vmem %s0, 15
    %v6 = vld [vmem:[%s5] sm:$0x1]
    %7 = vrot.lane.b32.xlu0 %v6, 120
    %v8 = vpop.permute.xlu0 %7
    %vm9 = vcmask 1048512
    %10 = vst.msk [vmem:[#allocation0] sm:$0x1] %vm9, %v8
    %s11 = scalar_lea.vmem %s0, 14
    %v12 = vld [vmem:[%s11] sm:$0x1]
    %13 = vrot.lane.b32.xlu0 %v12, 112
    %v14 = vpop.permute.xlu0 %13
    %vm15 = vcmask 982912
    %16 = vst.msk [vmem:[#allocation0] sm:$0x1] %vm15, %v14
    %s17 = scalar_lea.vmem %s0, 13
    %v18 = vld [vmem:[%s17] sm:$0x1]
    %19 = vrot.lane.b32.xlu0 %v18, 104
    %v20 = vpop.permute.xlu0 %19
    %vm21 = vcmask 917312
    %22 = vst.msk [vmem:[#allocation0] sm:$0x1] %vm21, %v20
    %s23 = scalar_lea.vmem %s0, 12
    %v24 = vld [vmem:[%s23] sm:$0x1]
    %25 = vrot.lane.b32.xlu0 %v24, 96
    %v26 = vpop.permute.xlu0 %25
    %vm27 = vcmask 851712
    %28 = vst.msk [vmem:[#allocation0] sm:$0x1] %vm27, %v26
    %s29 = scalar_lea.vmem %s0, 11
    %v30 = vld [vmem:[%s29] sm:$0x1]
    %31 = vrot.lane.b32.xlu0 %v30, 88
    %v32 = vpop.permute.xlu0 %31
    %vm33 = vcmask 786112
    %34 = vst.msk [vmem:[#allocation0] sm:$0x1] %vm33, %v32
    %s35 = scalar_lea.vmem %s0, 10
    %v36 = vld [vmem:[%s35] sm:$0x1]
    %37 = vrot.lane.b32.xlu0 %v36, 80
    %v38 = vpop.permute.xlu0 %37
    %vm39 = vcmask 720512
    %40 = vst.msk [vmem:[#allocation0] sm:$0x1] %vm39, %v38
    %s41 = scalar_lea.vmem %s0, 9
    %v42 = vld [vmem:[%s41] sm:$0x1]
    %43 = vrot.lane.b32.xlu0 %v42, 72
    %v44 = vpop.permute.xlu0 %43
    %vm45 = vcmask 654912
    %46 = vst.msk [vmem:[#allocation0] sm:$0x1] %vm45, %v44
    %s47 = scalar_lea.vmem %s0, 8
    %v48 = vld [vmem:[%s47] sm:$0x1]
    %49 = vrot.lane.b32.xlu0 %v48, 64
    %v50 = vpop.permute.xlu0 %49
    %vm51 = vcmask 589312
    %52 = vst.msk [vmem:[#allocation0] sm:$0x1] %vm51, %v50
    %s53 = scalar_lea.vmem %s0, 7
    %v54 = vld [vmem:[%s53] sm:$0x1]
    %55 = vrot.lane.b32.xlu0 %v54, 56
    %v56 = vpop.permute.xlu0 %55
    %vm57 = vcmask 523712
    %58 = vst.msk [vmem:[#allocation0] sm:$0x1] %vm57, %v56
    %s59 = scalar_lea.vmem %s0, 6
    %v60 = vld [vmem:[%s59] sm:$0x1]
    %61 = vrot.lane.b32.xlu0 %v60, 48
    %v62 = vpop.permute.xlu0 %61
    %vm63 = vcmask 458112
    %64 = vst.msk [vmem:[#allocation0] sm:$0x1] %vm63, %v62
    %s65 = scalar_lea.vmem %s0, 5
    %v66 = vld [vmem:[%s65] sm:$0x1]
    %67 = vrot.lane.b32.xlu0 %v66, 40
    %v68 = vpop.permute.xlu0 %67
    %vm69 = vcmask 392512
    %70 = vst.msk [vmem:[#allocation0] sm:$0x1] %vm69, %v68
    %s71 = scalar_lea.vmem %s0, 4
    %v72 = vld [vmem:[%s71] sm:$0x1]
    %73 = vrot.lane.b32.xlu0 %v72, 32
    %v74 = vpop.permute.xlu0 %73
    %vm75 = vcmask 326912
    %76 = vst.msk [vmem:[#allocation0] sm:$0x1] %vm75, %v74
    %s77 = scalar_lea.vmem %s0, 3
    %v78 = vld [vmem:[%s77] sm:$0x1]
    %79 = vrot.lane.b32.xlu0 %v78, 24
    %v80 = vpop.permute.xlu0 %79
    %vm81 = vcmask 261312
    %82 = vst.msk [vmem:[#allocation0] sm:$0x1] %vm81, %v80
    %s83 = scalar_lea.vmem %s0, 2
    %v84 = vld [vmem:[%s83] sm:$0x1]
    %85 = vrot.lane.b32.xlu0 %v84, 16
    %v86 = vpop.permute.xlu0 %85
    %vm87 = vcmask 195712
    %88 = vst.msk [vmem:[#allocation0] sm:$0x1] %vm87, %v86
    %s89 = scalar_lea.vmem %s0, 1
    %v90 = vld [vmem:[%s89] sm:$0x1]
    %91 = vrot.lane.b32.xlu0 %v90, 8
    %v92 = vpop.permute.xlu0 %91
    %vm93 = vcmask 130112
    %94 = vst.msk [vmem:[#allocation0] sm:$0x1] %vm93, %v92
    %s96 = sshllo.u32 0, 1
    %v98 = vld [vmem:[#allocation0] sm:%s96]
    %s99 = sshllo.u32 0, 1
    %100 = vst [vmem:[%s1] sm:%s99] %v98

// kernel: tile.19
$region0: #{tile.19}
  %s0 = inlined_call_operand.vmem [shape: f32[16,8], index: 0, kind: input, shape index: {}]
  %s1 = inlined_call_operand.vmem [shape: f32[1,128], index: 1, kind: output, shape index: {}]
  $region1: #{tile.19} parent=0
    #allocation0 [shape = 'u8[4096]{0}', space=vmem, size = 0x1000, scoped, tag = 'scoped mem for output reshape']
    %v2 = vld [vmem:[%s0] sm:$0x1]
    %vm3 = vcmask 64512
    %4 = vst.msk [vmem:[#allocation0] sm:$0x1] %vm3, %v2
    %s5 = scalar_lea.vmem %s0, 15
    %v6 = vld [vmem:[%s5] sm:$0x1]
    %7 = vrot.lane.b32.xlu0 %v6, 120
    %v8 = vpop.permute.xlu0 %7
    %vm9 = vcmask 1048512
    %10 = vst.msk [vmem:[#allocation0] sm:$0x1] %vm9, %v8
    %s11 = scalar_lea.vmem %s0, 14
    %v12 = vld [vmem:[%s11] sm:$0x1]
    %13 = vrot.lane.b32.xlu0 %v12, 112
    %v14 = vpop.permute.xlu0 %13
    %vm15 = vcmask 982912
    %16 = vst.msk [vmem:[#allocation0] sm:$0x1] %vm15, %v14
    %s17 = scalar_lea.vmem %s0, 13
    %v18 = vld [vmem:[%s17] sm:$0x1]
    %19 = vrot.lane.b32.xlu0 %v18, 104
    %v20 = vpop.permute.xlu0 %19
    %vm21 = vcmask 917312
    %22 = vst.msk [vmem:[#allocation0] sm:$0x1] %vm21, %v20
    %s23 = scalar_lea.vmem %s0, 12
    %v24 = vld [vmem:[%s23] sm:$0x1]
    %25 = vrot.lane.b32.xlu0 %v24, 96
    %v26 = vpop.permute.xlu0 %25
    %vm27 = vcmask 851712
    %28 = vst.msk [vmem:[#allocation0] sm:$0x1] %vm27, %v26
    %s29 = scalar_lea.vmem %s0, 11
    %v30 = vld [vmem:[%s29] sm:$0x1]
    %31 = vrot.lane.b32.xlu0 %v30, 88
    %v32 = vpop.permute.xlu0 %31
    %vm33 = vcmask 786112
    %34 = vst.msk [vmem:[#allocation0] sm:$0x1] %vm33, %v32
    %s35 = scalar_lea.vmem %s0, 10
    %v36 = vld [vmem:[%s35] sm:$0x1]
    %37 = vrot.lane.b32.xlu0 %v36, 80
    %v38 = vpop.permute.xlu0 %37
    %vm39 = vcmask 720512
    %40 = vst.msk [vmem:[#allocation0] sm:$0x1] %vm39, %v38
    %s41 = scalar_lea.vmem %s0, 9
    %v42 = vld [vmem:[%s41] sm:$0x1]
    %43 = vrot.lane.b32.xlu0 %v42, 72
    %v44 = vpop.permute.xlu0 %43
    %vm45 = vcmask 654912
    %46 = vst.msk [vmem:[#allocation0] sm:$0x1] %vm45, %v44
    %s47 = scalar_lea.vmem %s0, 8
    %v48 = vld [vmem:[%s47] sm:$0x1]
    %49 = vrot.lane.b32.xlu0 %v48, 64
    %v50 = vpop.permute.xlu0 %49
    %vm51 = vcmask 589312
    %52 = vst.msk [vmem:[#allocation0] sm:$0x1] %vm51, %v50
    %s53 = scalar_lea.vmem %s0, 7
    %v54 = vld [vmem:[%s53] sm:$0x1]
    %55 = vrot.lane.b32.xlu0 %v54, 56
    %v56 = vpop.permute.xlu0 %55
    %vm57 = vcmask 523712
    %58 = vst.msk [vmem:[#allocation0] sm:$0x1] %vm57, %v56
    %s59 = scalar_lea.vmem %s0, 6
    %v60 = vld [vmem:[%s59] sm:$0x1]
    %61 = vrot.lane.b32.xlu0 %v60, 48
    %v62 = vpop.permute.xlu0 %61
    %vm63 = vcmask 458112
    %64 = vst.msk [vmem:[#allocation0] sm:$0x1] %vm63, %v62
    %s65 = scalar_lea.vmem %s0, 5
    %v66 = vld [vmem:[%s65] sm:$0x1]
    %67 = vrot.lane.b32.xlu0 %v66, 40
    %v68 = vpop.permute.xlu0 %67
    %vm69 = vcmask 392512
    %70 = vst.msk [vmem:[#allocation0] sm:$0x1] %vm69, %v68
    %s71 = scalar_lea.vmem %s0, 4
    %v72 = vld [vmem:[%s71] sm:$0x1]
    %73 = vrot.lane.b32.xlu0 %v72, 32
    %v74 = vpop.permute.xlu0 %73
    %vm75 = vcmask 326912
    %76 = vst.msk [vmem:[#allocation0] sm:$0x1] %vm75, %v74
    %s77 = scalar_lea.vmem %s0, 3
    %v78 = vld [vmem:[%s77] sm:$0x1]
    %79 = vrot.lane.b32.xlu0 %v78, 24
    %v80 = vpop.permute.xlu0 %79
    %vm81 = vcmask 261312
    %82 = vst.msk [vmem:[#allocation0] sm:$0x1] %vm81, %v80
    %s83 = scalar_lea.vmem %s0, 2
    %v84 = vld [vmem:[%s83] sm:$0x1]
    %85 = vrot.lane.b32.xlu0 %v84, 16
    %v86 = vpop.permute.xlu0 %85
    %vm87 = vcmask 195712
    %88 = vst.msk [vmem:[#allocation0] sm:$0x1] %vm87, %v86
    %s89 = scalar_lea.vmem %s0, 1
    %v90 = vld [vmem:[%s89] sm:$0x1]
    %91 = vrot.lane.b32.xlu0 %v90, 8
    %v92 = vpop.permute.xlu0 %91
    %vm93 = vcmask 130112
    %94 = vst.msk [vmem:[#allocation0] sm:$0x1] %vm93, %v92
    %s96 = sshllo.u32 0, 1
    %v98 = vld [vmem:[#allocation0] sm:%s96]
    %s99 = sshllo.u32 0, 1
    %100 = vst [vmem:[%s1] sm:%s99] %v98

// kernel: block_forward.1
$region0: #{block_forward.1}
  #allocation0 [shape = 'u32[]', space=smem, size = 0x4, offset = 0x4, fixed_abs, tag = 'smem constant byte address 0x4 - core index']
  #allocation1 [shape = 'u32[144,128]{1,0:T(1,128)}', space=vmem, size = 0x12000, scoped, tag = 'internal scratch']
  #allocation2 [shape = 'f32[18,64]{1,0:T(8,128)}', space=vmem, size = 0x3000, scoped, tag = 'scratch operand']
  #allocation3 [shape = 'f32[18,144]{1,0:T(8,128)}', space=vmem, size = 0x6000, scoped, tag = 'scratch operand']
  %s0 = inlined_call_operand.vmem [shape: f32[2,16,64], index: 0, kind: input, shape index: {}]
  %s1 = inlined_call_operand.vmem [shape: f32[3,64,144], index: 1, kind: input, shape index: {}]
  %s2 = inlined_call_operand.vmem [shape: f32[1,144], index: 2, kind: input, shape index: {}]
  %s3 = inlined_call_operand.vmem [shape: f32[3,144,128], index: 3, kind: input, shape index: {}]
  %s4 = inlined_call_operand.vmem [shape: f32[1,128], index: 4, kind: input, shape index: {}]
  %s5 = inlined_call_operand.vmem [shape: f32[2,16,128], index: 5, kind: output, shape index: {}]
  %s6 = sld [smem:[#allocation0]]
  $region53: #{block_forward.1} parent=0
    _
  %s8 = ssub.s32 1, %s6
  %s9 = scalar_select 0, %s8, %s6
  loop: start=0, step=1, limit=4
  $region2: #{block_forward.1} parent=0 // loop_pre_header
    _
  $region3: #{block_forward.1} parent=0 // loop_header
    %s11 = sphi 0, %s15
    %p12 = scmp.ge.s32.totalorder %s11, 4
    %s21 = sphi 0, %s23
    %s24 = sphi 0, %s21
    %s25 = sphi 0, %s24
    %s41 = sphi 0, %s25
    %s45 = sphi 0, %s45
    %s47 = sphi 0, %s45
    %s48 = sphi 0, %s47
    %s62 = sphi 0, %s48
    %s66 = sphi 0, %s66
    %s68 = sphi 0, %s66
    %s69 = sphi 0, %s68
    %s83 = sphi 0, %s69
    %s87 = sphi 0, %s87
    %s89 = sphi 0, %s87
    %s90 = sphi 0, %s89
    %s104 = sphi 0, %s90
    %s108 = sphi 0, %s108
    %s110 = sphi 0, %s108
    %s111 = sphi 0, %s110
    %s125 = sphi 0, %s111
    %s131 = sphi 0, %s133
    %s134 = sphi 0, %s131
    %s135 = sphi 0, %s134
    %s151 = sphi 0, %s135
  $region4: #{block_forward.1} parent=0 // loop_header_branch
    %14 = sbr.rel (%p12) target = $region8
  $region5: #{block_forward.1} parent=0 // loop_body
    %s16 = ssub.s32 %s11, 1
    %s17 = ssub.s32 %s11, 2
    %s18 = sadd.s32 %s11, 1
    %s19 = ssub.s32 %s11, %s18
    %p20 = scmp.eq.s32.totalorder %s19, 0
    %s22 = sadd.s32 %s21, 1
    %s23 = scalar_select %p20, %s21, %s22
    %p26 = pneg %p20
    %p27 = scmp.eq.s32.totalorder %s11, 1
    %p28 = por %p26, %p27
    %p29 = scmp.ne.s32.totalorder %s21, %s24
    %p30 = scmp.eq.s32.totalorder %s11, 0
    %p31 = por %p29, %p30
    %p32 = scmp.ne.s32.totalorder %s21, %s24
    %p33 = scmp.eq.s32.totalorder %s16, 1
    %p34 = por %p32, %p33
    %p35 = scmp.ne.s32.totalorder %s24, %s25
    %p36 = scmp.eq.s32.totalorder %s16, 0
    %p37 = por %p35, %p36
    %p38 = scmp.ne.s32.totalorder %s24, %s25
    %p39 = scmp.eq.s32.totalorder %s17, 1
    %p40 = por %p38, %p39
    %p42 = scmp.ne.s32.totalorder %s25, %s41
    %p43 = scmp.eq.s32.totalorder %s17, 0
    %p44 = por %p42, %p43
    %s46 = sadd.s32 %s45, 1
    %p49 = scmp.eq.s32.totalorder %s11, 1
    %p50 = scmp.ne.s32.totalorder %s45, %s47
    %p51 = scmp.eq.s32.totalorder %s11, 0
    %p52 = por %p50, %p51
    %p53 = scmp.ne.s32.totalorder %s45, %s47
    %p54 = scmp.eq.s32.totalorder %s16, 1
    %p55 = por %p53, %p54
    %p56 = scmp.ne.s32.totalorder %s47, %s48
    %p57 = scmp.eq.s32.totalorder %s16, 0
    %p58 = por %p56, %p57
    %p59 = scmp.ne.s32.totalorder %s47, %s48
    %p60 = scmp.eq.s32.totalorder %s17, 1
    %p61 = por %p59, %p60
    %p63 = scmp.ne.s32.totalorder %s48, %s62
    %p64 = scmp.eq.s32.totalorder %s17, 0
    %p65 = por %p63, %p64
    %s67 = sadd.s32 %s66, 1
    %p70 = scmp.eq.s32.totalorder %s11, 1
    %p71 = scmp.ne.s32.totalorder %s66, %s68
    %p72 = scmp.eq.s32.totalorder %s11, 0
    %p73 = por %p71, %p72
    %p74 = scmp.ne.s32.totalorder %s66, %s68
    %p75 = scmp.eq.s32.totalorder %s16, 1
    %p76 = por %p74, %p75
    %p77 = scmp.ne.s32.totalorder %s68, %s69
    %p78 = scmp.eq.s32.totalorder %s16, 0
    %p79 = por %p77, %p78
    %p80 = scmp.ne.s32.totalorder %s68, %s69
    %p81 = scmp.eq.s32.totalorder %s17, 1
    %p82 = por %p80, %p81
    %p84 = scmp.ne.s32.totalorder %s69, %s83
    %p85 = scmp.eq.s32.totalorder %s17, 0
    %p86 = por %p84, %p85
    %s88 = sadd.s32 %s87, 1
    %p91 = scmp.eq.s32.totalorder %s11, 1
    %p92 = scmp.ne.s32.totalorder %s87, %s89
    %p93 = scmp.eq.s32.totalorder %s11, 0
    %p94 = por %p92, %p93
    %p95 = scmp.ne.s32.totalorder %s87, %s89
    %p96 = scmp.eq.s32.totalorder %s16, 1
    %p97 = por %p95, %p96
    %p98 = scmp.ne.s32.totalorder %s89, %s90
    %p99 = scmp.eq.s32.totalorder %s16, 0
    %p100 = por %p98, %p99
    %p101 = scmp.ne.s32.totalorder %s89, %s90
    %p102 = scmp.eq.s32.totalorder %s17, 1
    %p103 = por %p101, %p102
    %p105 = scmp.ne.s32.totalorder %s90, %s104
    %p106 = scmp.eq.s32.totalorder %s17, 0
    %p107 = por %p105, %p106
    %s109 = sadd.s32 %s108, 1
    %p112 = scmp.eq.s32.totalorder %s11, 1
    %p113 = scmp.ne.s32.totalorder %s108, %s110
    %p114 = scmp.eq.s32.totalorder %s11, 0
    %p115 = por %p113, %p114
    %p116 = scmp.ne.s32.totalorder %s108, %s110
    %p117 = scmp.eq.s32.totalorder %s16, 1
    %p118 = por %p116, %p117
    %p119 = scmp.ne.s32.totalorder %s110, %s111
    %p120 = scmp.eq.s32.totalorder %s16, 0
    %p121 = por %p119, %p120
    %p122 = scmp.ne.s32.totalorder %s110, %s111
    %p123 = scmp.eq.s32.totalorder %s17, 1
    %p124 = por %p122, %p123
    %p126 = scmp.ne.s32.totalorder %s111, %s125
    %p127 = scmp.eq.s32.totalorder %s17, 0
    %p128 = por %p126, %p127
    %s129 = ssub.s32 %s11, %s18
    %p130 = scmp.eq.s32.totalorder %s129, 0
    %s132 = sadd.s32 %s131, 1
    %s133 = scalar_select %p130, %s131, %s132
    %p136 = pneg %p130
    %p137 = scmp.eq.s32.totalorder %s11, 1
    %p138 = por %p136, %p137
    %p139 = scmp.ne.s32.totalorder %s131, %s134
    %p140 = scmp.eq.s32.totalorder %s11, 0
    %p141 = por %p139, %p140
    %p142 = scmp.ne.s32.totalorder %s131, %s134
    %p143 = scmp.eq.s32.totalorder %s16, 1
    %p144 = por %p142, %p143
    %p145 = scmp.ne.s32.totalorder %s134, %s135
    %p146 = scmp.eq.s32.totalorder %s16, 0
    %p147 = por %p145, %p146
    %p148 = scmp.ne.s32.totalorder %s134, %s135
    %p149 = scmp.eq.s32.totalorder %s17, 1
    %p150 = por %p148, %p149
    %p152 = scmp.ne.s32.totalorder %s135, %s151
    %p153 = scmp.eq.s32.totalorder %s17, 0
    %p154 = por %p152, %p153
    %p155 = scmp.le.s32.totalorder 1, %s11
    %p156 = scmp.lt.s32.totalorder %s11, 3
    %p157 = pnand %p155, %p156
    %p158 = pneg %p157
    // Predicated region
    $region9: #{block_forward.1} parent=5 // pred_check
      _
    $region10: #{block_forward.1} parent=5 // pred_check_branch
      %160 = sbr.rel (%p157) target = $region12
    $region11: #{block_forward.1} parent=5 // pred_region
      %s161 = ssub.s32 %s11, 1
      // Predicated region
      $region13: #{block_forward.1} parent=11 // pred_check
        %p162 = pneg %p58
      $region14: #{block_forward.1} parent=11 // pred_check_branch
        %164 = sbr.rel (%p162) target = $region16
      $region15: #{block_forward.1} parent=11 // pred_region
        _
      $region16: #{block_forward.1} parent=11 // pred_fallthru
        _
      // Predicated region
      $region17: #{block_forward.1} parent=11 // pred_check
        %p165 = pneg %p79
      $region18: #{block_forward.1} parent=11 // pred_check_branch
        %167 = sbr.rel (%p165) target = $region20
      $region19: #{block_forward.1} parent=11 // pred_region
        _
      $region20: #{block_forward.1} parent=11 // pred_fallthru
        _
      // Predicated region
      $region21: #{block_forward.1} parent=11 // pred_check
        %p168 = pneg %p100
      $region22: #{block_forward.1} parent=11 // pred_check_branch
        %170 = sbr.rel (%p168) target = $region24
      $region23: #{block_forward.1} parent=11 // pred_region
        _
      $region24: #{block_forward.1} parent=11 // pred_fallthru
        _
      // Predicated region
      $region25: #{block_forward.1} parent=11 // pred_check
        %p171 = pneg %p121
      $region26: #{block_forward.1} parent=11 // pred_check_branch
        %173 = sbr.rel (%p171) target = $region28
      $region27: #{block_forward.1} parent=11 // pred_region
        _
      $region28: #{block_forward.1} parent=11 // pred_fallthru
        _
    $region12: #{block_forward.1} parent=5 // pred_fallthru
      _
    %p174 = scmp.lt.s32.totalorder %s11, 2
    // Predicated region
    $region29: #{block_forward.1} parent=5 // pred_check
      %p175 = pneg %p174
    $region30: #{block_forward.1} parent=5 // pred_check_branch
      %177 = sbr.rel (%p175) target = $region32
    $region31: #{block_forward.1} parent=5 // pred_region
      // Predicated region
      $region33: #{block_forward.1} parent=31 // pred_check
        %p178 = pneg %p31
      $region34: #{block_forward.1} parent=31 // pred_check_branch
        %180 = sbr.rel (%p178) target = $region36
      $region35: #{block_forward.1} parent=31 // pred_region
        %p181 = scmp.lt.s32.totalorder %s11, 1
        %s182 = scalar_select %p181, %s11, 1
        %s183 = smul.addr %s182, 2
        %s184 = smul.addr %s183, 8
        %s185 = scalar_lea.vmem %s0, %s184
      $region36: #{block_forward.1} parent=31 // pred_fallthru
        _
    $region32: #{block_forward.1} parent=5 // pred_fallthru
      _
    %p186 = scmp.le.s32.totalorder 1, %s11
    %p187 = scmp.lt.s32.totalorder %s11, 3
    %p188 = pnand %p186, %p187
    %p189 = pneg %p188
    // Predicated region
    $region37: #{block_forward.1} parent=5 // pred_check
      _
    $region38: #{block_forward.1} parent=5 // pred_check_branch
      %191 = sbr.rel (%p188) target = $region40
    $region39: #{block_forward.1} parent=5 // pred_region
      %s192 = ssub.s32 %s11, 1
      %p193 = scmp.lt.s32.totalorder %s16, 1
      %s194 = scalar_select %p193, %s16, 1
      %s195 = smul.addr %s194, 2
      %s196 = smul.addr %s195, 8
      %s197 = scalar_lea.vmem %s0, %s196
      %p198 = pneg %p37
      %p199 = pneg %p34
      %p200 = pneg %p58
      %p201 = pneg %p55
      %p202 = pneg %p79
      %p203 = pneg %p76
      %p204 = pneg %p100
      %p205 = pneg %p97
      %p206 = pneg %p121
      %p207 = pneg %p118
      %p208 = pneg %p147
      %p209 = pneg %p144
      %p210 = scmp.lt.s32.totalorder %s16, 1
      %s211 = scalar_select %p210, %s16, 1
      %s212 = smul.addr %s211, 2
      %s213 = smul.addr %s212, 8
      %s214 = scalar_lea.vmem %s5, %s213
      %p215 = scmp.lt.s32.totalorder %s16, 1
      %s216 = scalar_select %p215, %s16, 1
      %s217 = smul.addr %s216, 2
      %s218 = smul.addr %s217, 8
      %s219 = scalar_lea.vmem %s0, %s218
      %p220 = scmp.lt.s32.totalorder %s16, 1
      %s221 = scalar_select %p220, %s16, 1
      %s222 = smul.addr %s221, 2
      %s223 = smul.addr %s222, 8
      %s224 = scalar_lea.vmem %s5, %s223
      %vm225 = vcmask 516096
      %226 = vst.msk [vmem:[#allocation2] sm:$0x1] %vm225, 0.0
      %227 = vst.msk [vmem:[#allocation2 + $0x11] sm:$0x1] %vm225, 0.0
      %v228 = vld [vmem:[%s219] sm:$0xff]
      %v229 = vld [vmem:[%s219 + $0x8] sm:$0xff]
      %vm230 = vcmask 523264
      %231 = vst.msk [vmem:[#allocation2 + $0x1] sm:$0xff] %vm230, %v228
      %232 = vst.msk [vmem:[#allocation2 + $0x9] sm:$0xff] %vm230, %v229
      %v233 = vld [vmem:[#allocation2] sm:$0xff]
      %v234 = vld [vmem:[#allocation2 + $0x8] sm:$0xff]
      %v235 = vld [vmem:[%s1] sm:$0xff]
      %v236 = vld [vmem:[%s1 + $0x8] sm:$0xff]
      %v237 = vld [vmem:[%s1 + $0x10] sm:$0xff]
      %v238 = vld [vmem:[%s1 + $0x18] sm:$0xff]
      %v239 = vld [vmem:[%s1 + $0x20] sm:$0xff]
      %v240 = vld [vmem:[%s1 + $0x28] sm:$0xff]
      %v241 = vld [vmem:[%s1 + $0x30] sm:$0xff]
      %v242 = vld [vmem:[%s1 + $0x38] sm:$0xff]
      %v243 = vld [vmem:[%s1 + $0x40] sm:$0xff]
      %v244 = vld [vmem:[%s1 + $0x48] sm:$0xff]
      %v245 = vld [vmem:[%s1 + $0x50] sm:$0xff]
      %v246 = vld [vmem:[%s1 + $0x58] sm:$0xff]
      %v247 = vld [vmem:[%s1 + $0x60] sm:$0xff]
      %v248 = vld [vmem:[%s1 + $0x68] sm:$0xff]
      %v249 = vld [vmem:[%s1 + $0x70] sm:$0xff]
      %v250 = vld [vmem:[%s1 + $0x78] sm:$0xff]
      %v251 = vld [vmem:[#allocation2 + $0x1] sm:$0xff]
      %v252 = vld [vmem:[#allocation2 + $0x9] sm:$0xff]
      %s253 = scalar_lea.vmem %s1, 128
      %v254 = vld [vmem:[%s253] sm:$0xff]
      %v255 = vld [vmem:[%s253 + $0x8] sm:$0xff]
      %v256 = vld [vmem:[%s253 + $0x10] sm:$0xff]
      %v257 = vld [vmem:[%s253 + $0x18] sm:$0xff]
      %v258 = vld [vmem:[%s253 + $0x20] sm:$0xff]
      %v259 = vld [vmem:[%s253 + $0x28] sm:$0xff]
      %v260 = vld [vmem:[%s253 + $0x30] sm:$0xff]
      %v261 = vld [vmem:[%s253 + $0x38] sm:$0xff]
      %v262 = vld [vmem:[%s253 + $0x40] sm:$0xff]
      %v263 = vld [vmem:[%s253 + $0x48] sm:$0xff]
      %v264 = vld [vmem:[%s253 + $0x50] sm:$0xff]
      %v265 = vld [vmem:[%s253 + $0x58] sm:$0xff]
      %v266 = vld [vmem:[%s253 + $0x60] sm:$0xff]
      %v267 = vld [vmem:[%s253 + $0x68] sm:$0xff]
      %v268 = vld [vmem:[%s253 + $0x70] sm:$0xff]
      %v269 = vld [vmem:[%s253 + $0x78] sm:$0xff]
      %v271 = vsel %vm230, %v251, 0
      %v274 = vsel %vm230, %v252, 0
      %276 = vmatprep.subr.mxu0 %v255
      %277 = vmatpush1.msra.mxu0 %v254
      %278 = vmatprep.subr.mxu0 %v257
      %279 = vmatpush1.msra.mxu0 %v256
      %280 = vmatprep.subr.mxu0 %v259
      %281 = vmatpush1.msra.mxu0 %v258
      %282 = vmatprep.subr.mxu0 %v261
      %283 = vmatpush1.msra.mxu0 %v260
      %284 = vmatprep.subr.mxu0 %v263
      %285 = vmatpush1.msra.mxu0 %v262
      %286 = vmatprep.subr.mxu0 %v265
      %287 = vmatpush1.msra.mxu0 %v264
      %288 = vmatprep.subr.mxu0 %v267
      %289 = vmatpush1.msra.mxu0 %v266
      %290 = vmatprep.subr.mxu0 %v269
      %291 = vmatpush1.msra.mxu0 %v268
      %292 = vmatprep.subr.mxu0 0.0
      %293 = vmatpush1.msra.mxu0 0.0
      %294 = vmatprep.subr.mxu0 0.0
      %295 = vmatpush1.msra.mxu0 0.0
      %296 = vmatprep.subr.mxu0 0.0
      %297 = vmatpush1.msra.mxu0 0.0
      %298 = vmatprep.subr.mxu0 0.0
      %299 = vmatpush1.msra.mxu0 0.0
      %300 = vmatprep.subr.mxu0 0.0
      %301 = vmatpush1.msra.mxu0 0.0
      %302 = vmatprep.subr.mxu0 0.0
      %303 = vmatpush1.msra.mxu0 0.0
      %304 = vmatprep.subr.mxu0 0.0
      %305 = vmatpush1.msra.mxu0 0.0
      %306 = vmatprep.subr.mxu0 0.0
      %307 = vmatpush1.msra.mxu0 0.0
      %308 = vmatprep.subr.mxu0 0.0
      %309 = vmatpush1.msra.mxu0 0.0
      %310 = vmatprep.subr.mxu0 0.0
      %311 = vmatpush1.msra.mxu0 0.0
      %312 = vmatprep.subr.mxu0 0.0
      %313 = vmatpush1.msra.mxu0 0.0
      %314 = vmatprep.subr.mxu0 0.0
      %315 = vmatpush1.msra.mxu0 0.0
      %316 = vmatprep.subr.mxu0 0.0
      %317 = vmatpush1.msra.mxu0 0.0
      %318 = vmatprep.subr.mxu0 0.0
      %319 = vmatpush1.msra.mxu0 0.0
      %320 = vmatprep.subr.mxu0 0.0
      %321 = vmatpush1.msra.mxu0 0.0
      %322 = vmatprep.subr.mxu0 0.0
      %323 = vmatpush1.msra.mxu0 0.0
      %324 = vmatprep.subr.mxu0 0.0
      %325 = vmatpush1.msra.mxu0 0.0
      %326 = vmatprep.subr.mxu0 0.0
      %327 = vmatpush1.msra.mxu0 0.0
      %328 = vmatprep.subr.mxu0 0.0
      %329 = vmatpush1.msra.mxu0 0.0
      %330 = vmatprep.subr.mxu0 0.0
      %331 = vmatpush1.msra.mxu0 0.0
      %332 = vmatprep.subr.mxu0 0.0
      %333 = vmatpush1.msra.mxu0 0.0
      %334 = vmatprep.subr.mxu0 0.0
      %335 = vmatpush1.msra.mxu0 0.0
      %336 = vmatprep.subr.mxu0 0.0
      %337 = vmatpush1.msra.mxu0 0.0
      %338 = vmatprep.subr.mxu0 0.0
      %339 = vmatpush1.msra.mxu0 0.0
      %340 = vmatprep.mubr.f32.mxu0 0.0
      %341 = vmatmul.mubr.f32.gmra.mrb[0].mxu0 %v271
      %v342 = vpop.f32.mrb[0].mxu0
      %v343 = vadd.f32 0.0, %v342
      %v344 = vpop.f32.mrb[0].mxu0
      %v345 = vadd.f32 0.0, %v344
      %346 = vmatprep.mubr.f32.mxu0 0.0
      %347 = vmatmul.mubr.f32.gmra.mrb[0].mxu0 %v274
      %v348 = vpop.f32.mrb[0].mxu0
      %v349 = vadd.f32 0.0, %v348
      %v350 = vpop.f32.mrb[0].mxu0
      %v351 = vadd.f32 0.0, %v350
      %352 = vdwg.mxu0
      %v354 = vsel %vm230, %v233, 0
      %v357 = vsel %vm230, %v234, 0
      %359 = vmatprep.subr.mxu0 %v236
      %360 = vmatpush1.msra.mxu0 %v235
      %361 = vmatprep.subr.mxu0 %v238
      %362 = vmatpush1.msra.mxu0 %v237
      %363 = vmatprep.subr.mxu0 %v240
      %364 = vmatpush1.msra.mxu0 %v239
      %365 = vmatprep.subr.mxu0 %v242
      %366 = vmatpush1.msra.mxu0 %v241
      %367 = vmatprep.subr.mxu0 %v244
      %368 = vmatpush1.msra.mxu0 %v243
      %369 = vmatprep.subr.mxu0 %v246
      %370 = vmatpush1.msra.mxu0 %v245
      %371 = vmatprep.subr.mxu0 %v248
      %372 = vmatpush1.msra.mxu0 %v247
      %373 = vmatprep.subr.mxu0 %v250
      %374 = vmatpush1.msra.mxu0 %v249
      %375 = vmatprep.subr.mxu0 0.0
      %376 = vmatpush1.msra.mxu0 0.0
      %377 = vmatprep.subr.mxu0 0.0
      %378 = vmatpush1.msra.mxu0 0.0
      %379 = vmatprep.subr.mxu0 0.0
      %380 = vmatpush1.msra.mxu0 0.0
      %381 = vmatprep.subr.mxu0 0.0
      %382 = vmatpush1.msra.mxu0 0.0
      %383 = vmatprep.subr.mxu0 0.0
      %384 = vmatpush1.msra.mxu0 0.0
      %385 = vmatprep.subr.mxu0 0.0
      %386 = vmatpush1.msra.mxu0 0.0
      %387 = vmatprep.subr.mxu0 0.0
      %388 = vmatpush1.msra.mxu0 0.0
      %389 = vmatprep.subr.mxu0 0.0
      %390 = vmatpush1.msra.mxu0 0.0
      %391 = vmatprep.subr.mxu0 0.0
      %392 = vmatpush1.msra.mxu0 0.0
      %393 = vmatprep.subr.mxu0 0.0
      %394 = vmatpush1.msra.mxu0 0.0
      %395 = vmatprep.subr.mxu0 0.0
      %396 = vmatpush1.msra.mxu0 0.0
      %397 = vmatprep.subr.mxu0 0.0
      %398 = vmatpush1.msra.mxu0 0.0
      %399 = vmatprep.subr.mxu0 0.0
      %400 = vmatpush1.msra.mxu0 0.0
      %401 = vmatprep.subr.mxu0 0.0
      %402 = vmatpush1.msra.mxu0 0.0
      %403 = vmatprep.subr.mxu0 0.0
      %404 = vmatpush1.msra.mxu0 0.0
      %405 = vmatprep.subr.mxu0 0.0
      %406 = vmatpush1.msra.mxu0 0.0
      %407 = vmatprep.subr.mxu0 0.0
      %408 = vmatpush1.msra.mxu0 0.0
      %409 = vmatprep.subr.mxu0 0.0
      %410 = vmatpush1.msra.mxu0 0.0
      %411 = vmatprep.subr.mxu0 0.0
      %412 = vmatpush1.msra.mxu0 0.0
      %413 = vmatprep.subr.mxu0 0.0
      %414 = vmatpush1.msra.mxu0 0.0
      %415 = vmatprep.subr.mxu0 0.0
      %416 = vmatpush1.msra.mxu0 0.0
      %417 = vmatprep.subr.mxu0 0.0
      %418 = vmatpush1.msra.mxu0 0.0
      %419 = vmatprep.subr.mxu0 0.0
      %420 = vmatpush1.msra.mxu0 0.0
      %421 = vmatprep.subr.mxu0 0.0
      %422 = vmatpush1.msra.mxu0 0.0
      %423 = vmatprep.mubr.f32.mxu0 0.0
      %424 = vmatmul.mubr.f32.gmra.mrb[0].mxu0 %v354
      %v425 = vpop.f32.mrb[0].mxu0
      %v426 = vadd.f32 %v343, %v425
      %v427 = vpop.f32.mrb[0].mxu0
      %v428 = vadd.f32 %v345, %v427
      %429 = vmatprep.mubr.f32.mxu0 0.0
      %430 = vmatmul.mubr.f32.gmra.mrb[0].mxu0 %v357
      %v431 = vpop.f32.mrb[0].mxu0
      %v432 = vadd.f32 %v349, %v431
      %v433 = vpop.f32.mrb[0].mxu0
      %v434 = vadd.f32 %v351, %v433
      %435 = vdwg.mxu0
      %v436 = vld [vmem:[#allocation2 + $0x2] sm:$0xff]
      %v437 = vld [vmem:[#allocation2 + $0xa] sm:$0xff]
      %s438 = scalar_lea.vmem %s1, 256
      %v439 = vld [vmem:[%s438] sm:$0xff]
      %v440 = vld [vmem:[%s438 + $0x8] sm:$0xff]
      %v441 = vld [vmem:[%s438 + $0x10] sm:$0xff]
      %v442 = vld [vmem:[%s438 + $0x18] sm:$0xff]
      %v443 = vld [vmem:[%s438 + $0x20] sm:$0xff]
      %v444 = vld [vmem:[%s438 + $0x28] sm:$0xff]
      %v445 = vld [vmem:[%s438 + $0x30] sm:$0xff]
      %v446 = vld [vmem:[%s438 + $0x38] sm:$0xff]
      %v447 = vld [vmem:[%s438 + $0x40] sm:$0xff]
      %v448 = vld [vmem:[%s438 + $0x48] sm:$0xff]
      %v449 = vld [vmem:[%s438 + $0x50] sm:$0xff]
      %v450 = vld [vmem:[%s438 + $0x58] sm:$0xff]
      %v451 = vld [vmem:[%s438 + $0x60] sm:$0xff]
      %v452 = vld [vmem:[%s438 + $0x68] sm:$0xff]
      %v453 = vld [vmem:[%s438 + $0x70] sm:$0xff]
      %v454 = vld [vmem:[%s438 + $0x78] sm:$0xff]
      %v456 = vsel %vm230, %v436, 0
      %v459 = vsel %vm230, %v437, 0
      %461 = vmatprep.subr.mxu0 %v440
      %462 = vmatpush1.msra.mxu0 %v439
      %463 = vmatprep.subr.mxu0 %v442
      %464 = vmatpush1.msra.mxu0 %v441
      %465 = vmatprep.subr.mxu0 %v444
      %466 = vmatpush1.msra.mxu0 %v443
      %467 = vmatprep.subr.mxu0 %v446
      %468 = vmatpush1.msra.mxu0 %v445
      %469 = vmatprep.subr.mxu0 %v448
      %470 = vmatpush1.msra.mxu0 %v447
      %471 = vmatprep.subr.mxu0 %v450
      %472 = vmatpush1.msra.mxu0 %v449
      %473 = vmatprep.subr.mxu0 %v452
      %474 = vmatpush1.msra.mxu0 %v451
      %475 = vmatprep.subr.mxu0 %v454
      %476 = vmatpush1.msra.mxu0 %v453
      %477 = vmatprep.subr.mxu0 0.0
      %478 = vmatpush1.msra.mxu0 0.0
      %479 = vmatprep.subr.mxu0 0.0
      %480 = vmatpush1.msra.mxu0 0.0
      %481 = vmatprep.subr.mxu0 0.0
      %482 = vmatpush1.msra.mxu0 0.0
      %483 = vmatprep.subr.mxu0 0.0
      %484 = vmatpush1.msra.mxu0 0.0
      %485 = vmatprep.subr.mxu0 0.0
      %486 = vmatpush1.msra.mxu0 0.0
      %487 = vmatprep.subr.mxu0 0.0
      %488 = vmatpush1.msra.mxu0 0.0
      %489 = vmatprep.subr.mxu0 0.0
      %490 = vmatpush1.msra.mxu0 0.0
      %491 = vmatprep.subr.mxu0 0.0
      %492 = vmatpush1.msra.mxu0 0.0
      %493 = vmatprep.subr.mxu0 0.0
      %494 = vmatpush1.msra.mxu0 0.0
      %495 = vmatprep.subr.mxu0 0.0
      %496 = vmatpush1.msra.mxu0 0.0
      %497 = vmatprep.subr.mxu0 0.0
      %498 = vmatpush1.msra.mxu0 0.0
      %499 = vmatprep.subr.mxu0 0.0
      %500 = vmatpush1.msra.mxu0 0.0
      %501 = vmatprep.subr.mxu0 0.0
      %502 = vmatpush1.msra.mxu0 0.0
      %503 = vmatprep.subr.mxu0 0.0
      %504 = vmatpush1.msra.mxu0 0.0
      %505 = vmatprep.subr.mxu0 0.0
      %506 = vmatpush1.msra.mxu0 0.0
      %507 = vmatprep.subr.mxu0 0.0
      %508 = vmatpush1.msra.mxu0 0.0
      %509 = vmatprep.subr.mxu0 0.0
      %510 = vmatpush1.msra.mxu0 0.0
      %511 = vmatprep.subr.mxu0 0.0
      %512 = vmatpush1.msra.mxu0 0.0
      %513 = vmatprep.subr.mxu0 0.0
      %514 = vmatpush1.msra.mxu0 0.0
      %515 = vmatprep.subr.mxu0 0.0
      %516 = vmatpush1.msra.mxu0 0.0
      %517 = vmatprep.subr.mxu0 0.0
      %518 = vmatpush1.msra.mxu0 0.0
      %519 = vmatprep.subr.mxu0 0.0
      %520 = vmatpush1.msra.mxu0 0.0
      %521 = vmatprep.subr.mxu0 0.0
      %522 = vmatpush1.msra.mxu0 0.0
      %523 = vmatprep.subr.mxu0 0.0
      %524 = vmatpush1.msra.mxu0 0.0
      %525 = vmatprep.mubr.f32.mxu0 0.0
      %526 = vmatmul.mubr.f32.gmra.mrb[0].mxu0 %v456
      %v527 = vpop.f32.mrb[0].mxu0
      %v528 = vadd.f32 0.0, %v527
      %v529 = vpop.f32.mrb[0].mxu0
      %v530 = vadd.f32 0.0, %v529
      %531 = vmatprep.mubr.f32.mxu0 0.0
      %532 = vmatmul.mubr.f32.gmra.mrb[0].mxu0 %v459
      %v533 = vpop.f32.mrb[0].mxu0
      %v534 = vadd.f32 0.0, %v533
      %v535 = vpop.f32.mrb[0].mxu0
      %v536 = vadd.f32 0.0, %v535
      %537 = vdwg.mxu0
      %v538 = vadd.f32 %v426, %v528
      %v539 = vadd.f32 %v428, %v530
      %v540 = vadd.f32 %v432, %v534
      %v541 = vadd.f32 %v434, %v536
      %v542 = vld [vmem:[%s2] sm:$0x3]
      %v544 = vlaneseq
      %v545 = vshrl.u32 %v544, 7
      %v546 = vsub.s32 0, %v545
      %v547 = vrot.slane %v542, %v546
      %v548 = vlaneseq
      %v549 = vshrl.u32 %v548, 7
      %v550 = vsub.s32 1, %v549
      %v551 = vrot.slane %v542, %v550
      %v554 = vadd.f32 %v538, %v547
      %v555 = vadd.f32 %v539, %v551
      %v556 = vadd.f32 %v540, %v547
      %v557 = vadd.f32 %v541, %v551
      %v558 = vmax.f32 %v554, 0.0
      %v559 = vmax.f32 %v555, 0.0
      %v560 = vmax.f32 %v556, 0.0
      %v561 = vmax.f32 %v557, 0.0
      %v562 = vlaneseq
      %vm563 = vcmp.ge.s32.totalorder %v562, 0
      %vm564 = vcmp.lt.s32.totalorder %v562, 144
      %vm565 = vmand %vm563, %vm564
      %566 = vst.msk [vmem:[#allocation3] ss:$8 sm:$0x3] %vm565, 0.0
      %567 = vst.msk [vmem:[#allocation3] ss:$8 sm:$0x0] %vm565, 0.0
      %s568 = scalar_lea.vmem [#allocation3], 33
      %569 = vst.msk [vmem:[%s568] ss:$8 sm:$0x3] %vm565, 0.0
      %570 = vst.msk [vmem:[%s568] ss:$8 sm:$0x0] %vm565, 0.0
      %vm575 = vcmask 1040384
      %v576 = vrot.slane %v558, 7
      %v577 = vrot.slane %v559, 7
      %v578 = vrot.slane %v560, 7
      %v579 = vsel %vm575, %v576, %v578
      %v580 = vrot.slane %v561, 7
      %v581 = vsel %vm575, %v577, %v580
      %588 = vst [vmem:[#allocation3] sm:$0xfe] %v576
      %vm589 = vcmask 130049
      %590 = vst.msk [vmem:[#allocation3 + $0x8] sm:$0xfe] %vm589, %v577
      %591 = vst [vmem:[#allocation3 + $0x10] sm:$0xff] %v579
      %vm592 = vcmask 130048
      %593 = vst.msk [vmem:[#allocation3 + $0x18] sm:$0xff] %vm592, %v581
      %594 = vst [vmem:[#allocation3 + $0x20] sm:$0x1] %v578
      %vm595 = vcmask 122880
      %596 = vst.msk [vmem:[#allocation3 + $0x28] sm:$0x1] %vm595, %v580
      %v597 = vld [vmem:[#allocation3] sm:$0xff]
      %v598 = vld [vmem:[#allocation3 + $0x8] sm:$0xff]
      %v599 = vld [vmem:[#allocation3 + $0x10] sm:$0xff]
      %v600 = vld [vmem:[#allocation3 + $0x18] sm:$0xff]
      %v601 = vld [vmem:[%s3] sm:$0xff]
      %v602 = vld [vmem:[%s3 + $0x8] sm:$0xff]
      %v603 = vld [vmem:[%s3 + $0x10] sm:$0xff]
      %v604 = vld [vmem:[%s3 + $0x18] sm:$0xff]
      %v605 = vld [vmem:[%s3 + $0x20] sm:$0xff]
      %v606 = vld [vmem:[%s3 + $0x28] sm:$0xff]
      %v607 = vld [vmem:[%s3 + $0x30] sm:$0xff]
      %v608 = vld [vmem:[%s3 + $0x38] sm:$0xff]
      %v609 = vld [vmem:[%s3 + $0x40] sm:$0xff]
      %v610 = vld [vmem:[%s3 + $0x48] sm:$0xff]
      %v611 = vld [vmem:[%s3 + $0x50] sm:$0xff]
      %v612 = vld [vmem:[%s3 + $0x58] sm:$0xff]
      %v613 = vld [vmem:[%s3 + $0x60] sm:$0xff]
      %v614 = vld [vmem:[%s3 + $0x68] sm:$0xff]
      %v615 = vld [vmem:[%s3 + $0x70] sm:$0xff]
      %v616 = vld [vmem:[%s3 + $0x78] sm:$0xff]
      %v617 = vld [vmem:[%s3 + $0x80] sm:$0xff]
      %v618 = vld [vmem:[%s3 + $0x88] sm:$0xff]
      %v619 = vld [vmem:[#allocation3] sm:$0xfe]
      %v620 = vld [vmem:[#allocation3 + $0x8] sm:$0xfe]
      %v621 = vld [vmem:[#allocation3 + $0x20] sm:$0x1]
      %v622 = vld [vmem:[#allocation3 + $0x28] sm:$0x1]
      %s623 = scalar_lea.vmem %s3, 144
      %v624 = vld [vmem:[%s623] sm:$0xff]
      %v625 = vld [vmem:[%s623 + $0x8] sm:$0xff]
      %v626 = vld [vmem:[%s623 + $0x10] sm:$0xff]
      %v627 = vld [vmem:[%s623 + $0x18] sm:$0xff]
      %v628 = vld [vmem:[%s623 + $0x20] sm:$0xff]
      %v629 = vld [vmem:[%s623 + $0x28] sm:$0xff]
      %v630 = vld [vmem:[%s623 + $0x30] sm:$0xff]
      %v631 = vld [vmem:[%s623 + $0x38] sm:$0xff]
      %v632 = vld [vmem:[%s623 + $0x40] sm:$0xff]
      %v633 = vld [vmem:[%s623 + $0x48] sm:$0xff]
      %v634 = vld [vmem:[%s623 + $0x50] sm:$0xff]
      %v635 = vld [vmem:[%s623 + $0x58] sm:$0xff]
      %v636 = vld [vmem:[%s623 + $0x60] sm:$0xff]
      %v637 = vld [vmem:[%s623 + $0x68] sm:$0xff]
      %v638 = vld [vmem:[%s623 + $0x70] sm:$0xff]
      %v639 = vld [vmem:[%s623 + $0x78] sm:$0xff]
      %v640 = vld [vmem:[%s623 + $0x80] sm:$0xff]
      %v641 = vld [vmem:[%s623 + $0x88] sm:$0xff]
      %vm648 = vcmask 1046528
      %v649 = vrot.slane %v619, 1
      %v650 = vrot.slane %v599, 1
      %v651 = vsel %vm648, %v649, %v650
      %v652 = vrot.slane %v620, 1
      %v653 = vrot.slane %v600, 1
      %v654 = vsel %vm648, %v652, %v653
      %v655 = vrot.slane %v621, 1
      %v656 = vsel %vm648, %v650, %v655
      %v657 = vrot.slane %v622, 1
      %v658 = vsel %vm648, %v653, %v657
      %v661 = vsel %vm592, %v654, 0
      %v663 = vsel %vm592, %v658, 0
      %665 = vmatprep.subr.mxu0 0.0
      %666 = vmatpush1.msra.mxu0 %v624
      %667 = vmatprep.subr.mxu0 0.0
      %668 = vmatpush1.msra.mxu0 %v625
      %669 = vmatprep.subr.mxu0 0.0
      %670 = vmatpush1.msra.mxu0 %v626
      %671 = vmatprep.subr.mxu0 0.0
      %672 = vmatpush1.msra.mxu0 %v627
      %673 = vmatprep.subr.mxu0 0.0
      %674 = vmatpush1.msra.mxu0 %v628
      %675 = vmatprep.subr.mxu0 0.0
      %676 = vmatpush1.msra.mxu0 %v629
      %677 = vmatprep.subr.mxu0 0.0
      %678 = vmatpush1.msra.mxu0 %v630
      %679 = vmatprep.subr.mxu0 0.0
      %680 = vmatpush1.msra.mxu0 %v631
      %681 = vmatprep.subr.mxu0 0.0
      %682 = vmatpush1.msra.mxu0 %v632
      %683 = vmatprep.subr.mxu0 0.0
      %684 = vmatpush1.msra.mxu0 %v633
      %685 = vmatprep.subr.mxu0 0.0
      %686 = vmatpush1.msra.mxu0 %v634
      %687 = vmatprep.subr.mxu0 0.0
      %688 = vmatpush1.msra.mxu0 %v635
      %689 = vmatprep.subr.mxu0 0.0
      %690 = vmatpush1.msra.mxu0 %v636
      %691 = vmatprep.subr.mxu0 0.0
      %692 = vmatpush1.msra.mxu0 %v637
      %693 = vmatprep.subr.mxu0 0.0
      %694 = vmatpush1.msra.mxu0 %v638
      %695 = vmatprep.subr.mxu0 0.0
      %696 = vmatpush1.msra.mxu0 %v639
      %697 = vmatprep.subr.mxu0 0.0
      %698 = vmatpush1.msra.mxu0 %v640
      %699 = vmatprep.subr.mxu0 0.0
      %700 = vmatpush1.msra.mxu0 %v641
      %701 = vmatprep.subr.mxu0 0.0
      %702 = vmatpush1.msra.mxu0 0.0
      %703 = vmatprep.subr.mxu0 0.0
      %704 = vmatpush1.msra.mxu0 0.0
      %705 = vmatprep.subr.mxu0 0.0
      %706 = vmatpush1.msra.mxu0 0.0
      %707 = vmatprep.subr.mxu0 0.0
      %708 = vmatpush1.msra.mxu0 0.0
      %709 = vmatprep.subr.mxu0 0.0
      %710 = vmatpush1.msra.mxu0 0.0
      %711 = vmatprep.subr.mxu0 0.0
      %712 = vmatpush1.msra.mxu0 0.0
      %713 = vmatprep.subr.mxu0 0.0
      %714 = vmatpush1.msra.mxu0 0.0
      %715 = vmatprep.subr.mxu0 0.0
      %716 = vmatpush1.msra.mxu0 0.0
      %717 = vmatprep.subr.mxu0 0.0
      %718 = vmatpush1.msra.mxu0 0.0
      %719 = vmatprep.subr.mxu0 0.0
      %720 = vmatpush1.msra.mxu0 0.0
      %721 = vmatprep.subr.mxu0 0.0
      %722 = vmatpush1.msra.mxu0 0.0
      %723 = vmatprep.subr.mxu0 0.0
      %724 = vmatpush1.msra.mxu0 0.0
      %725 = vmatprep.subr.mxu0 0.0
      %726 = vmatpush1.msra.mxu0 0.0
      %727 = vmatprep.subr.mxu0 0.0
      %728 = vmatpush1.msra.mxu0 0.0
      %729 = vmatprep.mubr.f32.mxu0 %v661
      %730 = vmatmul.mubr.f32.gmra.mrb[0].mxu0 %v651
      %v731 = vpop.f32.mrb[0].mxu0
      %v732 = vadd.f32 0.0, %v731
      %v733 = vpop.f32.mrb[0].mxu0
      %734 = vmatprep.mubr.f32.mxu0 %v663
      %735 = vmatmul.mubr.f32.gmra.mrb[0].mxu0 %v656
      %v736 = vpop.f32.mrb[0].mxu0
      %v737 = vadd.f32 0.0, %v736
      %v738 = vpop.f32.mrb[0].mxu0
      %739 = vdwg.mxu0
      %v741 = vsel %vm592, %v598, 0
      %v743 = vsel %vm592, %v600, 0
      %745 = vmatprep.subr.mxu0 0.0
      %746 = vmatpush1.msra.mxu0 %v601
      %747 = vmatprep.subr.mxu0 0.0
      %748 = vmatpush1.msra.mxu0 %v602
      %749 = vmatprep.subr.mxu0 0.0
      %750 = vmatpush1.msra.mxu0 %v603
      %751 = vmatprep.subr.mxu0 0.0
      %752 = vmatpush1.msra.mxu0 %v604
      %753 = vmatprep.subr.mxu0 0.0
      %754 = vmatpush1.msra.mxu0 %v605
      %755 = vmatprep.subr.mxu0 0.0
      %756 = vmatpush1.msra.mxu0 %v606
      %757 = vmatprep.subr.mxu0 0.0
      %758 = vmatpush1.msra.mxu0 %v607
      %759 = vmatprep.subr.mxu0 0.0
      %760 = vmatpush1.msra.mxu0 %v608
      %761 = vmatprep.subr.mxu0 0.0
      %762 = vmatpush1.msra.mxu0 %v609
      %763 = vmatprep.subr.mxu0 0.0
      %764 = vmatpush1.msra.mxu0 %v610
      %765 = vmatprep.subr.mxu0 0.0
      %766 = vmatpush1.msra.mxu0 %v611
      %767 = vmatprep.subr.mxu0 0.0
      %768 = vmatpush1.msra.mxu0 %v612
      %769 = vmatprep.subr.mxu0 0.0
      %770 = vmatpush1.msra.mxu0 %v613
      %771 = vmatprep.subr.mxu0 0.0
      %772 = vmatpush1.msra.mxu0 %v614
      %773 = vmatprep.subr.mxu0 0.0
      %774 = vmatpush1.msra.mxu0 %v615
      %775 = vmatprep.subr.mxu0 0.0
      %776 = vmatpush1.msra.mxu0 %v616
      %777 = vmatprep.subr.mxu0 0.0
      %778 = vmatpush1.msra.mxu0 %v617
      %779 = vmatprep.subr.mxu0 0.0
      %780 = vmatpush1.msra.mxu0 %v618
      %781 = vmatprep.subr.mxu0 0.0
      %782 = vmatpush1.msra.mxu0 0.0
      %783 = vmatprep.subr.mxu0 0.0
      %784 = vmatpush1.msra.mxu0 0.0
      %785 = vmatprep.subr.mxu0 0.0
      %786 = vmatpush1.msra.mxu0 0.0
      %787 = vmatprep.subr.mxu0 0.0
      %788 = vmatpush1.msra.mxu0 0.0
      %789 = vmatprep.subr.mxu0 0.0
      %790 = vmatpush1.msra.mxu0 0.0
      %791 = vmatprep.subr.mxu0 0.0
      %792 = vmatpush1.msra.mxu0 0.0
      %793 = vmatprep.subr.mxu0 0.0
      %794 = vmatpush1.msra.mxu0 0.0
      %795 = vmatprep.subr.mxu0 0.0
      %796 = vmatpush1.msra.mxu0 0.0
      %797 = vmatprep.subr.mxu0 0.0
      %798 = vmatpush1.msra.mxu0 0.0
      %799 = vmatprep.subr.mxu0 0.0
      %800 = vmatpush1.msra.mxu0 0.0
      %801 = vmatprep.subr.mxu0 0.0
      %802 = vmatpush1.msra.mxu0 0.0
      %803 = vmatprep.subr.mxu0 0.0
      %804 = vmatpush1.msra.mxu0 0.0
      %805 = vmatprep.subr.mxu0 0.0
      %806 = vmatpush1.msra.mxu0 0.0
      %807 = vmatprep.subr.mxu0 0.0
      %808 = vmatpush1.msra.mxu0 0.0
      %809 = vmatprep.mubr.f32.mxu0 %v741
      %810 = vmatmul.mubr.f32.gmra.mrb[0].mxu0 %v597
      %v811 = vpop.f32.mrb[0].mxu0
      %v812 = vadd.f32 %v732, %v811
      %v813 = vpop.f32.mrb[0].mxu0
      %814 = vmatprep.mubr.f32.mxu0 %v743
      %815 = vmatmul.mubr.f32.gmra.mrb[0].mxu0 %v599
      %v816 = vpop.f32.mrb[0].mxu0
      %v817 = vadd.f32 %v737, %v816
      %v818 = vpop.f32.mrb[0].mxu0
      %819 = vdwg.mxu0
      %v820 = vld [vmem:[#allocation3] sm:$0xfc]
      %v821 = vld [vmem:[#allocation3 + $0x8] sm:$0xfc]
      %v822 = vld [vmem:[#allocation3 + $0x20] sm:$0x3]
      %v823 = vld [vmem:[#allocation3 + $0x28] sm:$0x3]
      %s824 = scalar_lea.vmem %s3, 288
      %v825 = vld [vmem:[%s824] sm:$0xff]
      %v826 = vld [vmem:[%s824 + $0x8] sm:$0xff]
      %v827 = vld [vmem:[%s824 + $0x10] sm:$0xff]
      %v828 = vld [vmem:[%s824 + $0x18] sm:$0xff]
      %v829 = vld [vmem:[%s824 + $0x20] sm:$0xff]
      %v830 = vld [vmem:[%s824 + $0x28] sm:$0xff]
      %v831 = vld [vmem:[%s824 + $0x30] sm:$0xff]
      %v832 = vld [vmem:[%s824 + $0x38] sm:$0xff]
      %v833 = vld [vmem:[%s824 + $0x40] sm:$0xff]
      %v834 = vld [vmem:[%s824 + $0x48] sm:$0xff]
      %v835 = vld [vmem:[%s824 + $0x50] sm:$0xff]
      %v836 = vld [vmem:[%s824 + $0x58] sm:$0xff]
      %v837 = vld [vmem:[%s824 + $0x60] sm:$0xff]
      %v838 = vld [vmem:[%s824 + $0x68] sm:$0xff]
      %v839 = vld [vmem:[%s824 + $0x70] sm:$0xff]
      %v840 = vld [vmem:[%s824 + $0x78] sm:$0xff]
      %v841 = vld [vmem:[%s824 + $0x80] sm:$0xff]
      %v842 = vld [vmem:[%s824 + $0x88] sm:$0xff]
      %vm847 = vcmask 1045504
      %v848 = vrot.slane %v820, 2
      %v849 = vrot.slane %v599, 2
      %v850 = vsel %vm847, %v848, %v849
      %v851 = vrot.slane %v821, 2
      %v852 = vrot.slane %v600, 2
      %v853 = vsel %vm847, %v851, %v852
      %v854 = vrot.slane %v822, 2
      %v855 = vsel %vm847, %v849, %v854
      %v856 = vrot.slane %v823, 2
      %v857 = vsel %vm847, %v852, %v856
      %v860 = vsel %vm592, %v853, 0
      %v862 = vsel %vm592, %v857, 0
      %864 = vmatprep.subr.mxu0 0.0
      %865 = vmatpush1.msra.mxu0 %v825
      %866 = vmatprep.subr.mxu0 0.0
      %867 = vmatpush1.msra.mxu0 %v826
      %868 = vmatprep.subr.mxu0 0.0
      %869 = vmatpush1.msra.mxu0 %v827
      %870 = vmatprep.subr.mxu0 0.0
      %871 = vmatpush1.msra.mxu0 %v828
      %872 = vmatprep.subr.mxu0 0.0
      %873 = vmatpush1.msra.mxu0 %v829
      %874 = vmatprep.subr.mxu0 0.0
      %875 = vmatpush1.msra.mxu0 %v830
      %876 = vmatprep.subr.mxu0 0.0
      %877 = vmatpush1.msra.mxu0 %v831
      %878 = vmatprep.subr.mxu0 0.0
      %879 = vmatpush1.msra.mxu0 %v832
      %880 = vmatprep.subr.mxu0 0.0
      %881 = vmatpush1.msra.mxu0 %v833
      %882 = vmatprep.subr.mxu0 0.0
      %883 = vmatpush1.msra.mxu0 %v834
      %884 = vmatprep.subr.mxu0 0.0
      %885 = vmatpush1.msra.mxu0 %v835
      %886 = vmatprep.subr.mxu0 0.0
      %887 = vmatpush1.msra.mxu0 %v836
      %888 = vmatprep.subr.mxu0 0.0
      %889 = vmatpush1.msra.mxu0 %v837
      %890 = vmatprep.subr.mxu0 0.0
      %891 = vmatpush1.msra.mxu0 %v838
      %892 = vmatprep.subr.mxu0 0.0
      %893 = vmatpush1.msra.mxu0 %v839
      %894 = vmatprep.subr.mxu0 0.0
      %895 = vmatpush1.msra.mxu0 %v840
      %896 = vmatprep.subr.mxu0 0.0
      %897 = vmatpush1.msra.mxu0 %v841
      %898 = vmatprep.subr.mxu0 0.0
      %899 = vmatpush1.msra.mxu0 %v842
      %900 = vmatprep.subr.mxu0 0.0
      %901 = vmatpush1.msra.mxu0 0.0
      %902 = vmatprep.subr.mxu0 0.0
      %903 = vmatpush1.msra.mxu0 0.0
      %904 = vmatprep.subr.mxu0 0.0
      %905 = vmatpush1.msra.mxu0 0.0
      %906 = vmatprep.subr.mxu0 0.0
      %907 = vmatpush1.msra.mxu0 0.0
      %908 = vmatprep.subr.mxu0 0.0
      %909 = vmatpush1.msra.mxu0 0.0
      %910 = vmatprep.subr.mxu0 0.0
      %911 = vmatpush1.msra.mxu0 0.0
      %912 = vmatprep.subr.mxu0 0.0
      %913 = vmatpush1.msra.mxu0 0.0
      %914 = vmatprep.subr.mxu0 0.0
      %915 = vmatpush1.msra.mxu0 0.0
      %916 = vmatprep.subr.mxu0 0.0
      %917 = vmatpush1.msra.mxu0 0.0
      %918 = vmatprep.subr.mxu0 0.0
      %919 = vmatpush1.msra.mxu0 0.0
      %920 = vmatprep.subr.mxu0 0.0
      %921 = vmatpush1.msra.mxu0 0.0
      %922 = vmatprep.subr.mxu0 0.0
      %923 = vmatpush1.msra.mxu0 0.0
      %924 = vmatprep.subr.mxu0 0.0
      %925 = vmatpush1.msra.mxu0 0.0
      %926 = vmatprep.subr.mxu0 0.0
      %927 = vmatpush1.msra.mxu0 0.0
      %928 = vmatprep.mubr.f32.mxu0 %v860
      %929 = vmatmul.mubr.f32.gmra.mrb[0].mxu0 %v850
      %v930 = vpop.f32.mrb[0].mxu0
      %v931 = vadd.f32 0.0, %v930
      %v932 = vpop.f32.mrb[0].mxu0
      %933 = vmatprep.mubr.f32.mxu0 %v862
      %934 = vmatmul.mubr.f32.gmra.mrb[0].mxu0 %v855
      %v935 = vpop.f32.mrb[0].mxu0
      %v936 = vadd.f32 0.0, %v935
      %v937 = vpop.f32.mrb[0].mxu0
      %938 = vdwg.mxu0
      %v939 = vadd.f32 %v812, %v931
      %v940 = vadd.f32 %v817, %v936
      %v941 = vld [vmem:[%s4] sm:$0x1]
      %v943 = vlaneseq
      %v944 = vshrl.u32 %v943, 7
      %v945 = vsub.s32 0, %v944
      %v946 = vrot.slane %v941, %v945
      %v948 = vadd.f32 %v939, %v946
      %v949 = vadd.f32 %v940, %v946
      %v950 = vmax.f32 %v948, 0.0
      %v951 = vmax.f32 %v949, 0.0
      %952 = vst [vmem:[%s224] sm:$0xff] %v950
      %953 = vst [vmem:[%s224 + $0x8] sm:$0xff] %v951
      %p954 = scmp.lt.s32.totalorder %s16, 1
      %s955 = scalar_select %p954, %s16, 1
      %s956 = smul.addr %s955, 2
      %s957 = smul.addr %s956, 8
      %s958 = scalar_lea.vmem %s5, %s957
      // Predicated region
      $region41: #{block_forward.1} parent=39 // pred_check
        %p959 = pneg %p144
      $region42: #{block_forward.1} parent=39 // pred_check_branch
        %961 = sbr.rel (%p959) target = $region44
      $region43: #{block_forward.1} parent=39 // pred_region
        _
      $region44: #{block_forward.1} parent=39 // pred_fallthru
        _
    $region40: #{block_forward.1} parent=5 // pred_fallthru
      _
    %p962 = scmp.le.s32.totalorder 2, %s11
    // Predicated region
    $region45: #{block_forward.1} parent=5 // pred_check
      %p963 = pneg %p962
    $region46: #{block_forward.1} parent=5 // pred_check_branch
      %965 = sbr.rel (%p963) target = $region48
    $region47: #{block_forward.1} parent=5 // pred_region
      %s966 = ssub.s32 %s11, 2
      // Predicated region
      $region49: #{block_forward.1} parent=47 // pred_check
        %p967 = pneg %p150
      $region50: #{block_forward.1} parent=47 // pred_check_branch
        %969 = sbr.rel (%p967) target = $region52
      $region51: #{block_forward.1} parent=47 // pred_region
        %p970 = scmp.lt.s32.totalorder %s17, 1
        %s971 = scalar_select %p970, %s17, 1
        %s972 = smul.addr %s971, 2
        %s973 = smul.addr %s972, 8
        %s974 = scalar_lea.vmem %s5, %s973
      $region52: #{block_forward.1} parent=47 // pred_fallthru
        _
    $region48: #{block_forward.1} parent=5 // pred_fallthru
      _
  $region6: #{block_forward.1} parent=0 // loop_footer
    %s15 = sadd.s32 1, %s11
  $region7: #{block_forward.1} parent=0 // loop_footer_branch
    %10 = sbr.rel target = $region3
  $region8: #{block_forward.1} parent=0 // loop_exit
    _

</llo_original>
